<compile_context>
chip_gen: v6e
topology: v6e:2x2x1
jax: 0.10.0
libtpu: 0.0.40
codegen_flags: <defaults>
</compile_context>

<pallas_src>
import functools

import jax
import jax.numpy as jnp
import numpy as np
from jax import lax
from jax.experimental import pallas as pl
from jax.experimental.pallas import tpu as pltpu

_LANES = 128


def _round_up(x, m):
    return ((x + m - 1) // m) * m


def _pad2d(x, rows, cols):
    pr = rows - x.shape[0]
    pc = cols - x.shape[1]
    if pr == 0 and pc == 0:
        return x
    return jnp.pad(x, ((0, pr), (0, pc)))


def _supcon_kernel(fa_ref, fbt_ref, pk_ref, out_ref,
                   m_acc, l_acc, am_acc, sm_acc, al_acc, sl_acc, *,
                   temperature, base_temperature, batch_size, n_total, tm, tk):
    bi = pl.program_id(0)
    ki = pl.program_id(1)
    nk = pl.num_programs(1)
    nc = tk // _LANES
    neg_big = jnp.float32(-1e30)

    # ---- init lane-parallel accumulators for this anchor tile ----------------
    @pl.when(ki == 0)
    def _init():
        m_acc[...] = jnp.full(m_acc.shape, neg_big, m_acc.dtype)
        l_acc[...] = jnp.zeros(l_acc.shape, l_acc.dtype)
        am_acc[...] = jnp.zeros(am_acc.shape, am_acc.dtype)
        sm_acc[...] = jnp.zeros(sm_acc.shape, sm_acc.dtype)
        al_acc[...] = jnp.zeros(al_acc.shape, al_acc.dtype)
        sl_acc[...] = jnp.zeros(sl_acc.shape, sl_acc.dtype)

    # ---- anchor_dot_contrast for this (tm, tk) tile ---------------------------
    # similarity = (anchor @ contrast.T) / 2 ; adc = similarity / temperature.
    # rhs is pre-transposed in the wrapper -> natural MXU contraction, no vxpose.
    adc = lax.dot_general(fa_ref[...], fbt_ref[...], (((1,), (0,)), ((), ())),
                          preferred_element_type=jnp.float32)
    adc = adc * jnp.float32(0.5 / temperature)                    # (tm, tk) f32

    # Exclude padded columns from the row max (1-D iota, broadcast in the where).
    col_ids = ki * tk + lax.broadcasted_iota(jnp.int32, (1, tk), 1)
    adc = jnp.where(col_ids < n_total, adc, neg_big)

    # Unpack fused int8 mask stream: bit0 = mask*logits_mask, bit1 = logits_mask.
    p32 = pk_ref[...].astype(jnp.int32)
    mk = (p32 & 1).astype(jnp.float32)
    lm = (p32 >> 1).astype(jnp.float32)

    # ---- per-lane online max / denominator (VPU only, no XLU) -----------------
    m_tile = adc[:, 0:_LANES]
    for c in range(1, nc):
        m_tile = jnp.maximum(m_tile, adc[:, c * _LANES:(c + 1) * _LANES])

    m_prev = m_acc[...]
    m_new = jnp.maximum(m_prev, m_tile)                          # (tm, 128)
    l_run = l_acc[...] * jnp.exp(m_prev - m_new)                 # single rescale
    am = am_acc[...]
    sm = sm_acc[...]
    al = al_acc[...]
    sl = sl_acc[...]

    for c in range(nc):
        csl = slice(c * _LANES, (c + 1) * _LANES)
        a = adc[:, csl]
        mk_c = mk[:, csl]
        lm_c = lm[:, csl]
        l_run = l_run + jnp.exp(a - m_new) * lm_c                # exp(logits)*lmask
        am = am + a * mk_c                                       # sum mask*adc
        sm = sm + mk_c                                           # sum mask
        al = al + a * lm_c                                       # sum lmask*adc
        sl = sl + lm_c                                           # sum lmask

    m_acc[...] = m_new
    l_acc[...] = l_run
    am_acc[...] = am
    sm_acc[...] = sm
    al_acc[...] = al
    sl_acc[...] = sl

    # ---- finalize: cross-lane reductions once per anchor tile -----------------
    @pl.when(ki == nk - 1)
    def _finalize():
        m_lane = m_acc[...]
        l_lane = l_acc[...]
        m_row = jnp.max(m_lane, axis=1, keepdims=True)                        # (tm,1)
        l_row = jnp.sum(l_lane * jnp.exp(m_lane - m_row), axis=1, keepdims=True)
        s_am = jnp.sum(am_acc[...], axis=1, keepdims=True)
        s_m = jnp.sum(sm_acc[...], axis=1, keepdims=True)
        s_al = jnp.sum(al_acc[...], axis=1, keepdims=True)
        s_l = jnp.sum(sl_acc[...], axis=1, keepdims=True)

        log_denom = jnp.log(l_row + 1e-12)
        # sum_j mask*(adc - m - log_denom)
        sum_log_prob = s_am - (m_row + log_denom) * s_m
        mean_log_prob_pos = sum_log_prob / (s_m + 1e-12)         # exact divide
        loss_rows = jnp.float32(-(temperature / base_temperature)) * mean_log_prob_pos

        row_ids = bi * tm + lax.broadcasted_iota(jnp.int32, (tm, 1), 0)
        rv = row_ids < batch_size                                # drop padded anchors
        loss_sum = jnp.sum(jnp.where(rv, loss_rows, 0.0))
        pos_num = jnp.sum(jnp.where(rv, s_am, 0.0))
        pos_den = jnp.sum(jnp.where(rv, s_m, 0.0))
        neg_num = jnp.sum(jnp.where(rv, s_al, 0.0))
        neg_den = jnp.sum(jnp.where(rv, s_l, 0.0))

        row = lax.broadcasted_iota(jnp.int32, (8, 128), 0)
        tile = jnp.where(row == 0, loss_sum,
               jnp.where(row == 1, pos_num,
               jnp.where(row == 2, pos_den,
               jnp.where(row == 3, neg_num,
               jnp.where(row == 4, neg_den, 0.0)))))
        out_ref[0] = tile


def _vmem_budget_bytes():
    # Generation-aware budget: ~62% of physical VMEM, capped.  v7x (64 MiB)
    # ends up ~40 MiB, v5e/v6e (128 MiB) ~80 MiB.  Fallback is v7x-safe.
    try:
        cap = int(pltpu.get_tpu_info().vmem_capacity_bytes)
        return min(int(cap * 0.62), 96 * 1024 * 1024)
    except Exception:
        return 40 * 1024 * 1024


def supcon_loss(features, mask, neg_mask=None, batch_size=-1, device=None,
                other_features=None, temperature=0.07, base_temperature=0.07,
                block_b=256, block_n=2048):
    """JAX/Pallas equivalent of SupConLoss.forward (mask is not None branch).

    features: (N, C) array (bf16 recommended — MXU accumulates in f32).
    mask:     (B, N) binary array, B == batch_size.
    neg_mask: optional (B, N) binary array.
    other_features: optional (N2, C); if given, the contrast set is other_features.
    Returns (loss, (pos_stat, neg_stat)) as float32 scalars.
    """
    del device
    B = int(batch_size) if batch_size >= 0 else int(features.shape[0])
    feat_anchor = features[:B]
    feat_all = features if other_features is None else other_features
    N, C = feat_all.shape
    feat_bytes = np.dtype(features.dtype).itemsize

    # ---- build fused mask stream in the wrapper (scatter-diagonal included) ----
    mask_f = mask.astype(jnp.float32)
    if neg_mask is not None:
        lmask = neg_mask.astype(jnp.float32)
        idx = jnp.arange(B)
        lmask = lmask.at[idx, idx].set(0.0)          # torch.scatter(neg_mask, 1, arange(B), 0)
    else:
        lmask = jnp.ones_like(mask_f)                # torch.ones_like(mask)
    mask_eff = mask_f * lmask                        # mask = mask * logits_mask
    packed = ((mask_eff != 0).astype(jnp.int8)
              | ((lmask != 0).astype(jnp.int8) << 1))

    # ---- tile sizing (int8 mask wants tm % 32 == 0; lane dim % 128 == 0) ------
    tm = min(_round_up(B, 32), _round_up(max(block_b, 32), 32))
    if _round_up(B, tm) // tm == 1 and B > 32:
        # Guarantee >=2 anchor tiles so v7x megacore can split the parallel axis.
        tm = _round_up(-(-B // 2), 32)
    B_pad = _round_up(B, tm)
    nb = B_pad // tm

    tk = min(_round_up(max(block_n, 128), 128), _round_up(N, 128))
    budget = _vmem_budget_bytes()

    def est_vmem(tk_):
        per_buf = tm * C * feat_bytes + C * tk_ * feat_bytes + tm * tk_  # in-tiles
        scratch = 6 * tm * _LANES * 4
        return 2 * per_buf + scratch + 2 * 8 * 128 * 4
    while tk > 128 and est_vmem(tk) > int(budget * 0.8):
        tk -= 128
    N_pad = _round_up(N, tk)
    nk = N_pad // tk

    # ---- pad / lay out inputs --------------------------------------------------
    fa = _pad2d(feat_anchor, B_pad, C)
    fbt = _pad2d(jnp.transpose(feat_all), C, N_pad)      # one-time transpose: (C, N_pad)
    pk = _pad2d(packed, B_pad, N_pad)

    kernel = functools.partial(
        _supcon_kernel,
        temperature=float(temperature), base_temperature=float(base_temperature),
        batch_size=B, n_total=N, tm=tm, tk=tk)

    partials = pl.pallas_call(
        kernel,
        out_shape=jax.ShapeDtypeStruct((nb, 8, 128), jnp.float32),
        grid=(nb, nk),
        in_specs=[
            pl.BlockSpec((tm, C), lambda bi, ki: (bi, 0)),
            pl.BlockSpec((C, tk), lambda bi, ki: (0, ki)),
            pl.BlockSpec((tm, tk), lambda bi, ki: (bi, ki)),
        ],
        out_specs=pl.BlockSpec((1, 8, 128), lambda bi, ki: (bi, 0, 0)),
        scratch_shapes=[pltpu.VMEM((tm, _LANES), jnp.float32) for _ in range(6)],
        compiler_params=pltpu.CompilerParams(
            dimension_semantics=("parallel", "arbitrary"),
            vmem_limit_bytes=int(budget)),
    )(fa, fbt, pk)

    p = partials[:, :5, 0]                           # (nb, 5) per-tile partial sums
    loss = jnp.sum(p[:, 0]) / B
    # similarity = temperature * adc, so scale the accumulated numerators by T.
    pos_stat = temperature * jnp.sum(p[:, 1]) / jnp.sum(p[:, 2])
    neg_stat = temperature * jnp.sum(p[:, 3]) / jnp.sum(p[:, 4])
    return loss, (pos_stat, neg_stat)


def _supcon_ref(features, mask, neg_mask, batch_size,
                temperature=0.07, base_temperature=0.07):
    """Pure-JAX reference mirroring the PyTorch forward (mask is not None)."""
    B = batch_size
    mask = mask.astype(jnp.float32)
    similarity = jnp.matmul(features[:B], features.T) / 2.0
    adc = similarity / temperature
    logits = adc - jnp.max(adc, axis=1, keepdims=True)
    if neg_mask is None:
        logits_mask = jnp.ones_like(mask)
    else:
        logits_mask = neg_mask.astype(jnp.float32).at[
            jnp.arange(B), jnp.arange(B)].set(0.0)
    mask = mask * logits_mask
    exp_logits = jnp.exp(logits) * logits_mask
    log_prob = logits - jnp.log(exp_logits.sum(1, keepdims=True) + 1e-12)
    mlpp = (mask * log_prob).sum(1) / (mask.sum(1) + 1e-12)
    loss = (-(temperature / base_temperature) * mlpp).mean()
    return loss, ((similarity * mask).sum() / mask.sum(),
                  (similarity * logits_mask).sum() / logits_mask.sum())


if __name__ == "__main__":
    key = jax.random.PRNGKey(0)
    B, N, C = 72, 300, 32   # anchors, total contrast samples, feature dim

    k_feat, k_lab, k_neg = jax.random.split(key, 3)
    feats_f32 = jax.random.normal(k_feat, (N, C), dtype=jnp.float32)
    feats_f32 = feats_f32 / jnp.linalg.norm(feats_f32, axis=1, keepdims=True)
    features = feats_f32.astype(jnp.bfloat16)     # bf16 features -> bf16 MXU path
    feats_ref = features.astype(jnp.float32)      # reference sees identical values

    labels = jax.random.randint(k_lab, (N,), 0, 4)
    mask = (labels[:B, None] == labels[None, :]).astype(jnp.float32)       # (B, N)
    neg_mask = (jax.random.uniform(k_neg, (B, N)) > 0.2).astype(jnp.float32)

    # Small blocks so the 2-D grid (3 anchor tiles x 3 contrast tiles, padded on
    # both axes) is actually exercised at toy sizes.
    loss, (pos_stat, neg_stat) = supcon_loss(
        features, mask, neg_mask=neg_mask, batch_size=B,
        temperature=0.07, base_temperature=0.07, block_b=32, block_n=128)
    jax.block_until_ready((loss, pos_stat, neg_stat))

    ref_loss, (ref_pos, ref_neg) = _supcon_ref(feats_ref, mask, neg_mask, B)
    assert np.allclose(np.asarray(loss), np.asarray(ref_loss), rtol=2e-2, atol=1e-3), (loss, ref_loss)
    assert np.allclose(np.asarray(pos_stat), np.asarray(ref_pos), rtol=2e-2, atol=1e-3), (pos_stat, ref_pos)
    assert np.allclose(np.asarray(neg_stat), np.asarray(ref_neg), rtol=2e-2, atol=1e-3), (neg_stat, ref_neg)

    # neg_mask=None path (logits_mask == all-ones, still one fused int8 stream)
    loss2, (pos2, neg2) = supcon_loss(features, mask, neg_mask=None, batch_size=B,
                                      block_b=32, block_n=128)
    jax.block_until_ready((loss2, pos2, neg2))
    r_loss2, (r_pos2, r_neg2) = _supcon_ref(feats_ref, mask, None, B)
    assert np.allclose(np.asarray(loss2), np.asarray(r_loss2), rtol=2e-2, atol=1e-3), (loss2, r_loss2)
    assert np.allclose(np.asarray(pos2), np.asarray(r_pos2), rtol=2e-2, atol=1e-3), (pos2, r_pos2)
    assert np.allclose(np.asarray(neg2), np.asarray(r_neg2), rtol=2e-2, atol=1e-3), (neg2, r_neg2)

    # Default (large-tile) config also exercised once to validate budget logic.
    loss3, _ = supcon_loss(features, mask, neg_mask=neg_mask, batch_size=B)
    jax.block_until_ready(loss3)
    assert np.allclose(np.asarray(loss3), np.asarray(ref_loss), rtol=2e-2, atol=1e-3), (loss3, ref_loss)

    print("KERNEL_OK")
</pallas_src>

<mosaic_0001>
module attributes {stable_mosaic.version = 11 : i64} {
  func.func @_supcon_kernel(%arg0: i32, %arg1: i32, %arg2: memref<32x32xbf16, #tpu.memory_space<vmem>>, %arg3: memref<32x128xbf16, #tpu.memory_space<vmem>>, %arg4: memref<32x128xi8, #tpu.memory_space<vmem>>, %arg5: memref<1x8x128xf32, #tpu.memory_space<vmem>>, %arg6: memref<32x128xf32, #tpu.memory_space<vmem>>, %arg7: memref<32x128xf32, #tpu.memory_space<vmem>>, %arg8: memref<32x128xf32, #tpu.memory_space<vmem>>, %arg9: memref<32x128xf32, #tpu.memory_space<vmem>>, %arg10: memref<32x128xf32, #tpu.memory_space<vmem>>, %arg11: memref<32x128xf32, #tpu.memory_space<vmem>>) attributes {dimension_semantics = [#tpu.dimension_semantics<parallel>, #tpu.dimension_semantics<arbitrary>], iteration_bounds = array<i64: 3, 3>, scalar_prefetch = 0 : i64, scratch_operands = 6 : i64, tpu.core_type = #tpu.core_type<tc>, window_params = [{transform_indices = @transform_0, window_bounds = array<i64: 32, 32>}, {transform_indices = @transform_1, window_bounds = array<i64: 32, 128>}, {transform_indices = @transform_2, window_bounds = array<i64: 32, 128>}, {transform_indices = @transform_3, window_bounds = array<i64: 1, 8, 128>}]} {
    %c0_i32 = arith.constant 0 : i32
    %0 = arith.cmpi eq, %arg1, %c0_i32 : i32
    %1 = arith.extui %0 : i1 to i32
    %cst = arith.constant -1.000000e+30 : f32
    %c0_i32_0 = arith.constant 0 : i32
    %2 = arith.cmpi ne, %1, %c0_i32_0 : i32
    scf.if %2 {
      %55 = vector.broadcast %cst : f32 to vector<32x128xf32>
      %c0_35 = arith.constant 0 : index
      %c0_36 = arith.constant 0 : index
      %56 = vector.load %arg6[%c0_35, %c0_36] : memref<32x128xf32, #tpu.memory_space<vmem>>, vector<32x128xf32>
      tpu.vector_store %arg6[%c0_35, %c0_36], %55 {strides = array<i32>} : memref<32x128xf32, #tpu.memory_space<vmem>>, vector<32x128xf32>,
      %cst_37 = arith.constant 0.000000e+00 : f32
      %57 = vector.broadcast %cst_37 : f32 to vector<32x128xf32>
      %c0_38 = arith.constant 0 : index
      %c0_39 = arith.constant 0 : index
      %58 = vector.load %arg7[%c0_38, %c0_39] : memref<32x128xf32, #tpu.memory_space<vmem>>, vector<32x128xf32>
      tpu.vector_store %arg7[%c0_38, %c0_39], %57 {strides = array<i32>} : memref<32x128xf32, #tpu.memory_space<vmem>>, vector<32x128xf32>,
      %cst_40 = arith.constant 0.000000e+00 : f32
      %59 = vector.broadcast %cst_40 : f32 to vector<32x128xf32>
      %c0_41 = arith.constant 0 : index
      %c0_42 = arith.constant 0 : index
      %60 = vector.load %arg8[%c0_41, %c0_42] : memref<32x128xf32, #tpu.memory_space<vmem>>, vector<32x128xf32>
      tpu.vector_store %arg8[%c0_41, %c0_42], %59 {strides = array<i32>} : memref<32x128xf32, #tpu.memory_space<vmem>>, vector<32x128xf32>,
      %cst_43 = arith.constant 0.000000e+00 : f32
      %61 = vector.broadcast %cst_43 : f32 to vector<32x128xf32>
      %c0_44 = arith.constant 0 : index
      %c0_45 = arith.constant 0 : index
      %62 = vector.load %arg9[%c0_44, %c0_45] : memref<32x128xf32, #tpu.memory_space<vmem>>, vector<32x128xf32>
      tpu.vector_store %arg9[%c0_44, %c0_45], %61 {strides = array<i32>} : memref<32x128xf32, #tpu.memory_space<vmem>>, vector<32x128xf32>,
      %cst_46 = arith.constant 0.000000e+00 : f32
      %63 = vector.broadcast %cst_46 : f32 to vector<32x128xf32>
      %c0_47 = arith.constant 0 : index
      %c0_48 = arith.constant 0 : index
      %64 = vector.load %arg10[%c0_47, %c0_48] : memref<32x128xf32, #tpu.memory_space<vmem>>, vector<32x128xf32>
      tpu.vector_store %arg10[%c0_47, %c0_48], %63 {strides = array<i32>} : memref<32x128xf32, #tpu.memory_space<vmem>>, vector<32x128xf32>,
      %cst_49 = arith.constant 0.000000e+00 : f32
      %65 = vector.broadcast %cst_49 : f32 to vector<32x128xf32>
      %c0_50 = arith.constant 0 : index
      %c0_51 = arith.constant 0 : index
      %66 = vector.load %arg11[%c0_50, %c0_51] : memref<32x128xf32, #tpu.memory_space<vmem>>, vector<32x128xf32>
      tpu.vector_store %arg11[%c0_50, %c0_51], %65 {strides = array<i32>} : memref<32x128xf32, #tpu.memory_space<vmem>>, vector<32x128xf32>,
    } else {
    }
    %c0 = arith.constant 0 : index
    %c0_1 = arith.constant 0 : index
    %3 = vector.load %arg2[%c0, %c0_1] : memref<32x32xbf16, #tpu.memory_space<vmem>>, vector<32x32xbf16>
    %c0_2 = arith.constant 0 : index
    %c0_3 = arith.constant 0 : index
    %4 = vector.load %arg3[%c0_2, %c0_3] : memref<32x128xbf16, #tpu.memory_space<vmem>>, vector<32x128xbf16>
    %cst_4 = arith.constant dense<0.000000e+00> : vector<32x128xf32>
    %5 = tpu.matmul %3, %4, %cst_4 {dimension_numbers = #tpu.dot_dimension_numbers<[1], [0], [0], [1], [0, 0, 1, 1], [], []>} : vector<32x32xbf16>, vector<32x128xbf16>, vector<32x128xf32> -> vector<32x128xf32>
    %cst_5 = arith.constant 7.14285707 : f32
    %6 = vector.broadcast %cst_5 : f32 to vector<32x128xf32>
    %7 = arith.mulf %5, %6 : vector<32x128xf32>
    %c128_i32 = arith.constant 128 : i32
    %8 = arith.muli %arg1, %c128_i32 : i32
    %9 = tpu.iota {dimensions = array<i32: 1>} : vector<1x128xi32>
    %10 = vector.broadcast %8 : i32 to vector<1x128xi32>
    %11 = arith.addi %10, %9 : vector<1x128xi32>
    %c300_i32 = arith.constant 300 : i32
    %12 = vector.broadcast %c300_i32 : i32 to vector<1x128xi32>
    %13 = arith.cmpi slt, %11, %12 : vector<1x128xi32>
    %cst_6 = arith.constant -1.000000e+30 : f32
    %14 = vector.shape_cast %13 : vector<1x128xi1> to vector<1x128xi1>
    %15 = vector.broadcast %14 : vector<1x128xi1> to vector<32x128xi1>
    %16 = vector.broadcast %cst_6 : f32 to vector<32x128xf32>
    %17 = arith.select %15, %7, %16 : vector<32x128xi1>, vector<32x128xf32>
    %c0_7 = arith.constant 0 : index
    %c0_8 = arith.constant 0 : index
    %18 = vector.load %arg4[%c0_7, %c0_8] : memref<32x128xi8, #tpu.memory_space<vmem>>, vector<32x128xi8>
    %19 = arith.extsi %18 : vector<32x128xi8> to vector<32x128xi32>
    %c1_i32 = arith.constant 1 : i32
    %20 = vector.broadcast %c1_i32 : i32 to vector<32x128xi32>
    %21 = arith.andi %19, %20 : vector<32x128xi32>
    %22 = arith.sitofp %21 : vector<32x128xi32> to vector<32x128xf32>
    %c1_i32_9 = arith.constant 1 : i32
    %23 = vector.broadcast %c1_i32_9 : i32 to vector<32x128xi32>
    %24 = arith.shrsi %19, %23 : vector<32x128xi32>
    %25 = arith.sitofp %24 : vector<32x128xi32> to vector<32x128xf32>
    %c0_10 = arith.constant 0 : index
    %c0_11 = arith.constant 0 : index
    %26 = vector.load %arg6[%c0_10, %c0_11] : memref<32x128xf32, #tpu.memory_space<vmem>>, vector<32x128xf32>
    %27 = arith.maximumf %26, %17 : vector<32x128xf32>
    %c0_12 = arith.constant 0 : index
    %c0_13 = arith.constant 0 : index
    %28 = vector.load %arg7[%c0_12, %c0_13] : memref<32x128xf32, #tpu.memory_space<vmem>>, vector<32x128xf32>
    %29 = arith.subf %26, %27 : vector<32x128xf32>
    %30 = math.exp %29 : vector<32x128xf32>
    %31 = arith.mulf %28, %30 : vector<32x128xf32>
    %c0_14 = arith.constant 0 : index
    %c0_15 = arith.constant 0 : index
    %32 = vector.load %arg8[%c0_14, %c0_15] : memref<32x128xf32, #tpu.memory_space<vmem>>, vector<32x128xf32>
    %c0_16 = arith.constant 0 : index
    %c0_17 = arith.constant 0 : index
    %33 = vector.load %arg9[%c0_16, %c0_17] : memref<32x128xf32, #tpu.memory_space<vmem>>, vector<32x128xf32>
    %c0_18 = arith.constant 0 : index
    %c0_19 = arith.constant 0 : index
    %34 = vector.load %arg10[%c0_18, %c0_19] : memref<32x128xf32, #tpu.memory_space<vmem>>, vector<32x128xf32>
    %c0_20 = arith.constant 0 : index
    %c0_21 = arith.constant 0 : index
    %35 = vector.load %arg11[%c0_20, %c0_21] : memref<32x128xf32, #tpu.memory_space<vmem>>, vector<32x128xf32>
    %36 = arith.subf %17, %27 : vector<32x128xf32>
    %37 = math.exp %36 : vector<32x128xf32>
    %38 = arith.mulf %37, %25 : vector<32x128xf32>
    %39 = arith.addf %31, %38 : vector<32x128xf32>
    %40 = arith.mulf %17, %22 : vector<32x128xf32>
    %41 = arith.addf %32, %40 : vector<32x128xf32>
    %42 = arith.addf %33, %22 : vector<32x128xf32>
    %43 = arith.mulf %17, %25 : vector<32x128xf32>
    %44 = arith.addf %34, %43 : vector<32x128xf32>
    %45 = arith.addf %35, %25 : vector<32x128xf32>
    %c0_22 = arith.constant 0 : index
    %c0_23 = arith.constant 0 : index
    %46 = vector.load %arg6[%c0_22, %c0_23] : memref<32x128xf32, #tpu.memory_space<vmem>>, vector<32x128xf32>
    tpu.vector_store %arg6[%c0_22, %c0_23], %27 {strides = array<i32>} : memref<32x128xf32, #tpu.memory_space<vmem>>, vector<32x128xf32>,
    %c0_24 = arith.constant 0 : index
    %c0_25 = arith.constant 0 : index
    %47 = vector.load %arg7[%c0_24, %c0_25] : memref<32x128xf32, #tpu.memory_space<vmem>>, vector<32x128xf32>
    tpu.vector_store %arg7[%c0_24, %c0_25], %39 {strides = array<i32>} : memref<32x128xf32, #tpu.memory_space<vmem>>, vector<32x128xf32>,
    %c0_26 = arith.constant 0 : index
    %c0_27 = arith.constant 0 : index
    %48 = vector.load %arg8[%c0_26, %c0_27] : memref<32x128xf32, #tpu.memory_space<vmem>>, vector<32x128xf32>
    tpu.vector_store %arg8[%c0_26, %c0_27], %41 {strides = array<i32>} : memref<32x128xf32, #tpu.memory_space<vmem>>, vector<32x128xf32>,
    %c0_28 = arith.constant 0 : index
    %c0_29 = arith.constant 0 : index
    %49 = vector.load %arg9[%c0_28, %c0_29] : memref<32x128xf32, #tpu.memory_space<vmem>>, vector<32x128xf32>
    tpu.vector_store %arg9[%c0_28, %c0_29], %42 {strides = array<i32>} : memref<32x128xf32, #tpu.memory_space<vmem>>, vector<32x128xf32>,
    %c0_30 = arith.constant 0 : index
    %c0_31 = arith.constant 0 : index
    %50 = vector.load %arg10[%c0_30, %c0_31] : memref<32x128xf32, #tpu.memory_space<vmem>>, vector<32x128xf32>
    tpu.vector_store %arg10[%c0_30, %c0_31], %44 {strides = array<i32>} : memref<32x128xf32, #tpu.memory_space<vmem>>, vector<32x128xf32>,
    %c0_32 = arith.constant 0 : index
    %c0_33 = arith.constant 0 : index
    %51 = vector.load %arg11[%c0_32, %c0_33] : memref<32x128xf32, #tpu.memory_space<vmem>>, vector<32x128xf32>
    tpu.vector_store %arg11[%c0_32, %c0_33], %45 {strides = array<i32>} : memref<32x128xf32, #tpu.memory_space<vmem>>, vector<32x128xf32>,
    %c2_i32 = arith.constant 2 : i32
    %52 = arith.cmpi eq, %arg1, %c2_i32 : i32
    %53 = arith.extui %52 : i1 to i32
    %c0_i32_34 = arith.constant 0 : i32
    %54 = arith.cmpi ne, %53, %c0_i32_34 : i32
    scf.if %54 {
      %c0_35 = arith.constant 0 : index
      %c0_36 = arith.constant 0 : index
      %55 = vector.load %arg6[%c0_35, %c0_36] : memref<32x128xf32, #tpu.memory_space<vmem>>, vector<32x128xf32>
      %c0_37 = arith.constant 0 : index
      %c0_38 = arith.constant 0 : index
      %56 = vector.load %arg7[%c0_37, %c0_38] : memref<32x128xf32, #tpu.memory_space<vmem>>, vector<32x128xf32>
      %cst_39 = arith.constant dense<0xFF800000> : vector<32xf32>
      %57 = vector.multi_reduction <maximumf>, %55, %cst_39 [1] : vector<32x128xf32> to vector<32xf32>
      %58 = vector.shape_cast %57 : vector<32xf32> to vector<32x1xf32>
      %59 = vector.broadcast %58 : vector<32x1xf32> to vector<32x128xf32>
      %60 = arith.subf %55, %59 : vector<32x128xf32>
      %61 = math.exp %60 : vector<32x128xf32>
      %62 = arith.mulf %56, %61 : vector<32x128xf32>
      %cst_40 = arith.constant dense<0.000000e+00> : vector<32xf32>
      %63 = vector.multi_reduction <add>, %62, %cst_40 [1] : vector<32x128xf32> to vector<32xf32>
      %64 = vector.shape_cast %63 : vector<32xf32> to vector<32x1xf32>
      %c0_41 = arith.constant 0 : index
      %c0_42 = arith.constant 0 : index
      %65 = vector.load %arg8[%c0_41, %c0_42] : memref<32x128xf32, #tpu.memory_space<vmem>>, vector<32x128xf32>
      %cst_43 = arith.constant dense<0.000000e+00> : vector<32xf32>
      %66 = vector.multi_reduction <add>, %65, %cst_43 [1] : vector<32x128xf32> to vector<32xf32>
      %67 = vector.shape_cast %66 : vector<32xf32> to vector<32x1xf32>
      %c0_44 = arith.constant 0 : index
      %c0_45 = arith.constant 0 : index
      %68 = vector.load %arg9[%c0_44, %c0_45] : memref<32x128xf32, #tpu.memory_space<vmem>>, vector<32x128xf32>
      %cst_46 = arith.constant dense<0.000000e+00> : vector<32xf32>
      %69 = vector.multi_reduction <add>, %68, %cst_46 [1] : vector<32x128xf32> to vector<32xf32>
      %70 = vector.shape_cast %69 : vector<32xf32> to vector<32x1xf32>
      %c0_47 = arith.constant 0 : index
      %c0_48 = arith.constant 0 : index
      %71 = vector.load %arg10[%c0_47, %c0_48] : memref<32x128xf32, #tpu.memory_space<vmem>>, vector<32x128xf32>
      %cst_49 = arith.constant dense<0.000000e+00> : vector<32xf32>
      %72 = vector.multi_reduction <add>, %71, %cst_49 [1] : vector<32x128xf32> to vector<32xf32>
      %73 = vector.shape_cast %72 : vector<32xf32> to vector<32x1xf32>
      %c0_50 = arith.constant 0 : index
      %c0_51 = arith.constant 0 : index
      %74 = vector.load %arg11[%c0_50, %c0_51] : memref<32x128xf32, #tpu.memory_space<vmem>>, vector<32x128xf32>
      %cst_52 = arith.constant dense<0.000000e+00> : vector<32xf32>
      %75 = vector.multi_reduction <add>, %74, %cst_52 [1] : vector<32x128xf32> to vector<32xf32>
      %76 = vector.shape_cast %75 : vector<32xf32> to vector<32x1xf32>
      %cst_53 = arith.constant 9.99999996E-13 : f32
      %77 = vector.broadcast %cst_53 : f32 to vector<32x1xf32>
      %78 = arith.addf %64, %77 : vector<32x1xf32>
      %79 = math.log %78 : vector<32x1xf32>
      %80 = arith.addf %58, %79 : vector<32x1xf32>
      %81 = arith.mulf %80, %70 : vector<32x1xf32>
      %82 = arith.subf %67, %81 : vector<32x1xf32>
      %cst_54 = arith.constant 9.99999996E-13 : f32
      %83 = vector.broadcast %cst_54 : f32 to vector<32x1xf32>
      %84 = arith.addf %70, %83 : vector<32x1xf32>
      %85 = arith.divf %82, %84 : vector<32x1xf32>
      %cst_55 = arith.constant -1.000000e+00 : f32
      %86 = vector.broadcast %cst_55 : f32 to vector<32x1xf32>
      %87 = arith.mulf %86, %85 : vector<32x1xf32>
      %c32_i32 = arith.constant 32 : i32
      %88 = arith.muli %arg0, %c32_i32 : i32
      %89 = tpu.iota {dimensions = array<i32: 0>} : vector<32x1xi32>
      %90 = vector.broadcast %88 : i32 to vector<32x1xi32>
      %91 = arith.addi %90, %89 : vector<32x1xi32>
      %c72_i32 = arith.constant 72 : i32
      %92 = vector.broadcast %c72_i32 : i32 to vector<32x1xi32>
      %93 = arith.cmpi slt, %91, %92 : vector<32x1xi32>
      %cst_56 = arith.constant 0.000000e+00 : f32
      %94 = vector.broadcast %cst_56 : f32 to vector<32x1xf32>
      %95 = arith.select %93, %87, %94 : vector<32x1xi1>, vector<32x1xf32>
      %96 = vector.shape_cast %95 : vector<32x1xf32> to vector<1x32x1xf32>
      %cst_57 = arith.constant dense<0.000000e+00> : vector<1xf32>
      %97 = vector.multi_reduction <add>, %96, %cst_57 [1, 2] : vector<1x32x1xf32> to vector<1xf32>
      %98 = vector.shape_cast %97 : vector<1xf32> to vector<1x1x1xf32>
      %99 = vector.extract %98[0, 0, 0] : f32 from vector<1x1x1xf32>
      %cst_58 = arith.constant 0.000000e+00 : f32
      %100 = vector.broadcast %cst_58 : f32 to vector<32x1xf32>
      %101 = arith.select %93, %67, %100 : vector<32x1xi1>, vector<32x1xf32>
      %102 = vector.shape_cast %101 : vector<32x1xf32> to vector<1x32x1xf32>
      %cst_59 = arith.constant dense<0.000000e+00> : vector<1xf32>
      %103 = vector.multi_reduction <add>, %102, %cst_59 [1, 2] : vector<1x32x1xf32> to vector<1xf32>
      %104 = vector.shape_cast %103 : vector<1xf32> to vector<1x1x1xf32>
      %105 = vector.extract %104[0, 0, 0] : f32 from vector<1x1x1xf32>
      %cst_60 = arith.constant 0.000000e+00 : f32
      %106 = vector.broadcast %cst_60 : f32 to vector<32x1xf32>
      %107 = arith.select %93, %70, %106 : vector<32x1xi1>, vector<32x1xf32>
      %108 = vector.shape_cast %107 : vector<32x1xf32> to vector<1x32x1xf32>
      %cst_61 = arith.constant dense<0.000000e+00> : vector<1xf32>
      %109 = vector.multi_reduction <add>, %108, %cst_61 [1, 2] : vector<1x32x1xf32> to vector<1xf32>
      %110 = vector.shape_cast %109 : vector<1xf32> to vector<1x1x1xf32>
      %111 = vector.extract %110[0, 0, 0] : f32 from vector<1x1x1xf32>
      %cst_62 = arith.constant 0.000000e+00 : f32
      %112 = vector.broadcast %cst_62 : f32 to vector<32x1xf32>
      %113 = arith.select %93, %73, %112 : vector<32x1xi1>, vector<32x1xf32>
      %114 = vector.shape_cast %113 : vector<32x1xf32> to vector<1x32x1xf32>
      %cst_63 = arith.constant dense<0.000000e+00> : vector<1xf32>
      %115 = vector.multi_reduction <add>, %114, %cst_63 [1, 2] : vector<1x32x1xf32> to vector<1xf32>
      %116 = vector.shape_cast %115 : vector<1xf32> to vector<1x1x1xf32>
      %117 = vector.extract %116[0, 0, 0] : f32 from vector<1x1x1xf32>
      %cst_64 = arith.constant 0.000000e+00 : f32
      %118 = vector.broadcast %cst_64 : f32 to vector<32x1xf32>
      %119 = arith.select %93, %76, %118 : vector<32x1xi1>, vector<32x1xf32>
      %120 = vector.shape_cast %119 : vector<32x1xf32> to vector<1x32x1xf32>
      %cst_65 = arith.constant dense<0.000000e+00> : vector<1xf32>
      %121 = vector.multi_reduction <add>, %120, %cst_65 [1, 2] : vector<1x32x1xf32> to vector<1xf32>
      %122 = vector.shape_cast %121 : vector<1xf32> to vector<1x1x1xf32>
      %123 = vector.extract %122[0, 0, 0] : f32 from vector<1x1x1xf32>
      %124 = tpu.iota {dimensions = array<i32: 0>} : vector<8x128xi32>
      %c0_i32_66 = arith.constant 0 : i32
      %125 = vector.broadcast %c0_i32_66 : i32 to vector<8x128xi32>
      %126 = arith.cmpi eq, %124, %125 : vector<8x128xi32>
      %c1_i32_67 = arith.constant 1 : i32
      %127 = vector.broadcast %c1_i32_67 : i32 to vector<8x128xi32>
      %128 = arith.cmpi eq, %124, %127 : vector<8x128xi32>
      %c2_i32_68 = arith.constant 2 : i32
      %129 = vector.broadcast %c2_i32_68 : i32 to vector<8x128xi32>
      %130 = arith.cmpi eq, %124, %129 : vector<8x128xi32>
      %c3_i32 = arith.constant 3 : i32
      %131 = vector.broadcast %c3_i32 : i32 to vector<8x128xi32>
      %132 = arith.cmpi eq, %124, %131 : vector<8x128xi32>
      %c4_i32 = arith.constant 4 : i32
      %133 = vector.broadcast %c4_i32 : i32 to vector<8x128xi32>
      %134 = arith.cmpi eq, %124, %133 : vector<8x128xi32>
      %cst_69 = arith.constant 0.000000e+00 : f32
      %135 = vector.broadcast %123 : f32 to vector<8x128xf32>
      %136 = vector.broadcast %cst_69 : f32 to vector<8x128xf32>
      %137 = arith.select %134, %135, %136 : vector<8x128xi1>, vector<8x128xf32>
      %138 = vector.broadcast %117 : f32 to vector<8x128xf32>
      %139 = arith.select %132, %138, %137 : vector<8x128xi1>, vector<8x128xf32>
      %140 = vector.broadcast %111 : f32 to vector<8x128xf32>
      %141 = arith.select %130, %140, %139 : vector<8x128xi1>, vector<8x128xf32>
      %142 = vector.broadcast %105 : f32 to vector<8x128xf32>
      %143 = arith.select %128, %142, %141 : vector<8x128xi1>, vector<8x128xf32>
      %144 = vector.broadcast %99 : f32 to vector<8x128xf32>
      %145 = arith.select %126, %144, %143 : vector<8x128xi1>, vector<8x128xf32>
      %c0_70 = arith.constant 0 : index
      %c0_71 = arith.constant 0 : index
      %c0_72 = arith.constant 0 : index
      %146 = vector.load %arg5[%c0_70, %c0_71, %c0_72] : memref<1x8x128xf32, #tpu.memory_space<vmem>>, vector<1x8x128xf32>
      %147 = vector.shape_cast %146 : vector<1x8x128xf32> to vector<8x128xf32>
      %148 = vector.shape_cast %145 : vector<8x128xf32> to vector<1x8x128xf32>
      tpu.vector_store %arg5[%c0_70, %c0_71, %c0_72], %148 {strides = array<i32>} : memref<1x8x128xf32, #tpu.memory_space<vmem>>, vector<1x8x128xf32>,
    } else {
    }
    return
  }
  func.func @transform_0(%arg0: i32, %arg1: i32) -> (i32, i32) {
    %c0_i32 = arith.constant 0 : i32
    %c0_i32_0 = arith.constant 0 : i32
    return %arg0, %c0_i32 : i32, i32
  }
  func.func @transform_1(%arg0: i32, %arg1: i32) -> (i32, i32) {
    %c0_i32 = arith.constant 0 : i32
    %c0_i32_0 = arith.constant 0 : i32
    return %c0_i32, %arg1 : i32, i32
  }
  func.func @transform_2(%arg0: i32, %arg1: i32) -> (i32, i32) {
    %c0_i32 = arith.constant 0 : i32
    return %arg0, %arg1 : i32, i32
  }
  func.func @transform_3(%arg0: i32, %arg1: i32) -> (i32, i32, i32) {
    %c0_i32 = arith.constant 0 : i32
    %c0_i32_0 = arith.constant 0 : i32
    %c0_i32_1 = arith.constant 0 : i32
    return %arg0, %c0_i32, %c0_i32_0 : i32, i32, i32
  }
}

</mosaic_0001>

<llo_original>
// kernel: tpu_custom_call.1
$region0: #{tpu_custom_call.1}
  #allocation0 [shape = 'u32[]', space=smem, size = 0x4, offset = 0x4, fixed_abs, tag = 'smem constant byte address 0x4 - core index']
  #allocation1 [shape = 'u32[144,128]{1,0:T(1,128)}', space=vmem, size = 0x12000, scoped, tag = 'internal scratch']
  #allocation2 [shape = 'f32[32,128]{1,0:T(8,128)}', space=vmem, size = 0x4000, scoped, tag = 'scratch operand']
  #allocation3 [shape = 'f32[32,128]{1,0:T(8,128)}', space=vmem, size = 0x4000, scoped, tag = 'scratch operand']
  #allocation4 [shape = 'f32[32,128]{1,0:T(8,128)}', space=vmem, size = 0x4000, scoped, tag = 'scratch operand']
  #allocation5 [shape = 'f32[32,128]{1,0:T(8,128)}', space=vmem, size = 0x4000, scoped, tag = 'scratch operand']
  #allocation6 [shape = 'f32[32,128]{1,0:T(8,128)}', space=vmem, size = 0x4000, scoped, tag = 'scratch operand']
  #allocation7 [shape = 'f32[32,128]{1,0:T(8,128)}', space=vmem, size = 0x4000, scoped, tag = 'scratch operand']
  %s0 = inlined_call_operand.vmem [shape: bf16[96,32], index: 0, kind: input, shape index: {}]
  %s1 = inlined_call_operand.vmem [shape: bf16[32,384], index: 1, kind: input, shape index: {}]
  %s2 = inlined_call_operand.hbm [shape: s8[96,384], index: 2, kind: input, shape index: {}]
  %s3 = inlined_call_operand.hbm [shape: f32[3,8,128], index: 3, kind: output, shape index: {}]
  %s4 = sld [smem:[#allocation0]]
  $region98: #{tpu_custom_call.1} parent=0
    _
  %s6 = ssub.s32 1, %s4
  %s7 = scalar_select 0, %s6, %s4
  $region1: #{tpu_custom_call.1} parent=0
    #allocation8 [shape = 'u8[16384]{0}', space=vmem, size = 0x4000, scoped, tag = 'input window, operand 1']
    #allocation9 [shape = 'u8[8192]{0}', space=vmem, size = 0x2000, scoped, tag = 'input window, operand 2']
    #allocation10 [shape = 's32[2]{0}', space=sflag, size = 0x8, scoped, tag = 'scoped memory for tpu_custom_call.1']
    #allocation11 [shape = 's32[2]{0}', space=sflag, size = 0x8, scoped, tag = 'scoped memory for tpu_custom_call.1']
    #allocation12 [shape = 'u8[8192]{0}', space=vmem, size = 0x2000, scoped, tag = 'output window, operand 0']
    %8 = vsyncpa [#allocation10], 0
    %s9 = scalar_lea.sflag [#allocation10], 1
    %10 = vsyncpa %s9, 0
    %11 = vsyncpa [#allocation11], 0
    %s12 = scalar_lea.sflag [#allocation11], 1
    %13 = vsyncpa %s12, 0
    loop: start=0, step=1, limit=11
    $region2: #{tpu_custom_call.1} parent=1 // loop_pre_header
      _
    $region3: #{tpu_custom_call.1} parent=1 // loop_header
      %s15 = sphi 0, %s19
      %p16 = scmp.ge.s32.totalorder %s15, 11
      %s22 = sphi 0, %s34
      %s23 = sphi 0, %s30
      %s24 = sphi 0, %s22
      %s25 = sphi 0, %s23
      %s26 = sphi 0, %s24
      %s27 = sphi 0, %s25
      %s37 = sphi 0, %s39
      %s40 = sphi 0, %s37
      %s41 = sphi 0, %s40
      %s57 = sphi 0, %s41
      %s63 = sphi 0, %s65
      %s66 = sphi 0, %s63
      %s67 = sphi 0, %s66
      %s83 = sphi 0, %s67
      %s91 = sphi 0, %s93
      %s94 = sphi 0, %s91
      %s95 = sphi 0, %s94
      %s111 = sphi 0, %s95
      %s117 = sphi 0, %s119
      %s120 = sphi 0, %s117
      %s121 = sphi 0, %s120
      %s137 = sphi 0, %s121
    $region4: #{tpu_custom_call.1} parent=1 // loop_header_branch
      %18 = sbr.rel (%p16) target = $region8
    $region5: #{tpu_custom_call.1} parent=1 // loop_body
      %s20 = ssub.s32 %s15, 1
      %s21 = ssub.s32 %s15, 2
      %s28 = sadd.s32 1, %s23
      %p29 = scmp.ge.s32.totalorder %s28, 3
      %s30 = scalar_select %p29, 0, %s28
      %s31 = sadd.s32 1, %s22
      %s32 = scalar_select %p29, %s31, %s22
      %p33 = scmp.ge.s32.totalorder %s32, 3
      %s34 = scalar_select %p33, 0, %s32
      %s35 = ssub.s32 %s22, %s34
      %p36 = scmp.eq.s32.totalorder %s35, 0
      %s38 = sadd.s32 %s37, 1
      %s39 = scalar_select %p36, %s37, %s38
      %p42 = pneg %p36
      %p43 = scmp.eq.s32.totalorder %s15, 8
      %p44 = por %p42, %p43
      %p45 = scmp.ne.s32.totalorder %s37, %s40
      %p46 = scmp.eq.s32.totalorder %s15, 0
      %p47 = por %p45, %p46
      %p48 = scmp.ne.s32.totalorder %s37, %s40
      %p49 = scmp.eq.s32.totalorder %s20, 8
      %p50 = por %p48, %p49
      %p51 = scmp.ne.s32.totalorder %s40, %s41
      %p52 = scmp.eq.s32.totalorder %s20, 0
      %p53 = por %p51, %p52
      %p54 = scmp.ne.s32.totalorder %s40, %s41
      %p55 = scmp.eq.s32.totalorder %s21, 8
      %p56 = por %p54, %p55
      %p58 = scmp.ne.s32.totalorder %s41, %s57
      %p59 = scmp.eq.s32.totalorder %s21, 0
      %p60 = por %p58, %p59
      %s61 = ssub.s32 %s23, %s30
      %p62 = scmp.eq.s32.totalorder %s61, 0
      %s64 = sadd.s32 %s63, 1
      %s65 = scalar_select %p62, %s63, %s64
      %p68 = pneg %p62
      %p69 = scmp.eq.s32.totalorder %s15, 8
      %p70 = por %p68, %p69
      %p71 = scmp.ne.s32.totalorder %s63, %s66
      %p72 = scmp.eq.s32.totalorder %s15, 0
      %p73 = por %p71, %p72
      %p74 = scmp.ne.s32.totalorder %s63, %s66
      %p75 = scmp.eq.s32.totalorder %s20, 8
      %p76 = por %p74, %p75
      %p77 = scmp.ne.s32.totalorder %s66, %s67
      %p78 = scmp.eq.s32.totalorder %s20, 0
      %p79 = por %p77, %p78
      %p80 = scmp.ne.s32.totalorder %s66, %s67
      %p81 = scmp.eq.s32.totalorder %s21, 8
      %p82 = por %p80, %p81
      %p84 = scmp.ne.s32.totalorder %s67, %s83
      %p85 = scmp.eq.s32.totalorder %s21, 0
      %p86 = por %p84, %p85
      %s87 = ssub.s32 %s22, %s34
      %s88 = ssub.s32 %s23, %s30
      %s89 = sor.u32 %s87, %s88
      %p90 = scmp.eq.s32.totalorder %s89, 0
      %s92 = sadd.s32 %s91, 1
      %s93 = scalar_select %p90, %s91, %s92
      %p96 = pneg %p90
      %p97 = scmp.eq.s32.totalorder %s15, 8
      %p98 = por %p96, %p97
      %p99 = scmp.ne.s32.totalorder %s91, %s94
      %p100 = scmp.eq.s32.totalorder %s15, 0
      %p101 = por %p99, %p100
      %p102 = scmp.ne.s32.totalorder %s91, %s94
      %p103 = scmp.eq.s32.totalorder %s20, 8
      %p104 = por %p102, %p103
      %p105 = scmp.ne.s32.totalorder %s94, %s95
      %p106 = scmp.eq.s32.totalorder %s20, 0
      %p107 = por %p105, %p106
      %p108 = scmp.ne.s32.totalorder %s94, %s95
      %p109 = scmp.eq.s32.totalorder %s21, 8
      %p110 = por %p108, %p109
      %p112 = scmp.ne.s32.totalorder %s95, %s111
      %p113 = scmp.eq.s32.totalorder %s21, 0
      %p114 = por %p112, %p113
      %s115 = ssub.s32 %s22, %s34
      %p116 = scmp.eq.s32.totalorder %s115, 0
      %s118 = sadd.s32 %s117, 1
      %s119 = scalar_select %p116, %s117, %s118
      %p122 = pneg %p116
      %p123 = scmp.eq.s32.totalorder %s15, 8
      %p124 = por %p122, %p123
      %p125 = scmp.ne.s32.totalorder %s117, %s120
      %p126 = scmp.eq.s32.totalorder %s15, 0
      %p127 = por %p125, %p126
      %p128 = scmp.ne.s32.totalorder %s117, %s120
      %p129 = scmp.eq.s32.totalorder %s20, 8
      %p130 = por %p128, %p129
      %p131 = scmp.ne.s32.totalorder %s120, %s121
      %p132 = scmp.eq.s32.totalorder %s20, 0
      %p133 = por %p131, %p132
      %p134 = scmp.ne.s32.totalorder %s120, %s121
      %p135 = scmp.eq.s32.totalorder %s21, 8
      %p136 = por %p134, %p135
      %p138 = scmp.ne.s32.totalorder %s121, %s137
      %p139 = scmp.eq.s32.totalorder %s21, 0
      %p140 = por %p138, %p139
      %p141 = scmp.le.s32.totalorder 1, %s15
      %p142 = scmp.lt.s32.totalorder %s15, 10
      %p143 = pnand %p141, %p142
      %p144 = pneg %p143
      // Predicated region
      $region9: #{tpu_custom_call.1} parent=5 // pred_check
        _
      $region10: #{tpu_custom_call.1} parent=5 // pred_check_branch
        %146 = sbr.rel (%p143) target = $region12
      $region11: #{tpu_custom_call.1} parent=5 // pred_region
        %s147 = ssub.s32 %s15, 1
      $region12: #{tpu_custom_call.1} parent=5 // pred_fallthru
        _
      %p148 = scmp.lt.s32.totalorder %s15, 9
      // Predicated region
      $region13: #{tpu_custom_call.1} parent=5 // pred_check
        %p149 = pneg %p148
      $region14: #{tpu_custom_call.1} parent=5 // pred_check_branch
        %151 = sbr.rel (%p149) target = $region16
      $region15: #{tpu_custom_call.1} parent=5 // pred_region
        // Predicated region
        $region17: #{tpu_custom_call.1} parent=15 // pred_check
          %p152 = pneg %p47
        $region18: #{tpu_custom_call.1} parent=15 // pred_check_branch
          %154 = sbr.rel (%p152) target = $region20
        $region19: #{tpu_custom_call.1} parent=15 // pred_region
          %s155 = smul.u32 4, %s22
          %p156 = scmp.lt.s32.totalorder %s155, 11
          %s157 = scalar_select %p156, %s155, 11
          %s158 = smul.addr %s157, 4
          %s159 = scalar_lea.vmem %s0, %s158
          %s160 = smul.u32 4, %s22
        $region20: #{tpu_custom_call.1} parent=15 // pred_fallthru
          _
        // Predicated region
        $region21: #{tpu_custom_call.1} parent=15 // pred_check
          %p161 = pneg %p73
        $region22: #{tpu_custom_call.1} parent=15 // pred_check_branch
          %163 = sbr.rel (%p161) target = $region24
        $region23: #{tpu_custom_call.1} parent=15 // pred_region
          %s164 = sand.u32 %s63, 1
          %s165 = sand.u32 %s63, 1
          %s166 = smul.addr %s165, 16
          %s167 = scalar_lea.vmem [#allocation8], %s166
          %s168 = smul.addr %s23, 4
          %s169 = scalar_lea.vmem %s1, %s168
          // Predicated region
          $region25: #{tpu_custom_call.1} parent=23 // pred_check
            _
          $region26: #{tpu_custom_call.1} parent=23 // pred_check_branch
            %171 = sbr.rel (0) target = $region28
          $region27: #{tpu_custom_call.1} parent=23 // pred_region
            // Predicated region
            $region29: #{tpu_custom_call.1} parent=27 // pred_check
              _
            $region30: #{tpu_custom_call.1} parent=27 // pred_check_branch
              %173 = sbr.rel target = $region32
            $region31: #{tpu_custom_call.1} parent=27 // pred_region
              // Predicated region
              $region44: #{tpu_custom_call.1} parent=31 // pred_check
                _
              $region45: #{tpu_custom_call.1} parent=31 // pred_check_branch
                %195 = sbr.rel (0) target = $region47
              $region46: #{tpu_custom_call.1} parent=31 // pred_region
                loop: start=0, step=1, limit=1
                $region48: #{tpu_custom_call.1} parent=46 // loop_pre_header
                  _
                $region49: #{tpu_custom_call.1} parent=46 // loop_header
                  %s197 = sphi 0, %s201
                  %p198 = scmp.ge.s32.totalorder %s197, 1
                  %s202 = sphi %s169, %s169
                  %s203 = sphi %s167, %s167
                $region50: #{tpu_custom_call.1} parent=46 // loop_header_branch
                  %200 = sbr.rel (%p198) target = $region54
                $region51: #{tpu_custom_call.1} parent=46 // loop_body
                  _
                $region52: #{tpu_custom_call.1} parent=46 // loop_footer
                  %s201 = sadd.s32 1, %s197
                $region53: #{tpu_custom_call.1} parent=46 // loop_footer_branch
                  %196 = sbr.rel target = $region49
                $region54: #{tpu_custom_call.1} parent=46 // loop_exit
                  _
                %s205 = ssub.s32 16, 1
                loop: start=0, step=1, limit=1
                $region55: #{tpu_custom_call.1} parent=46 // loop_pre_header
                  _
                $region56: #{tpu_custom_call.1} parent=46 // loop_header
                  %s207 = sphi 0, %s211
                  %p208 = scmp.ge.s32.totalorder %s207, 1
                  %s212 = sphi %s169, %s169
                  %s213 = sphi %s167, %s167
                $region57: #{tpu_custom_call.1} parent=46 // loop_header_branch
                  %210 = sbr.rel (%p208) target = $region61
                $region58: #{tpu_custom_call.1} parent=46 // loop_body
                  %v214 = vld [vmem:[%s212] sm:%s205]
                  %215 = vst [vmem:[%s213] sm:%s205] %v214
                  %v216 = vld [vmem:[%s212 + $0xc] sm:%s205]
                  %217 = vst [vmem:[%s213 + $0x4] sm:%s205] %v216
                  %v218 = vld [vmem:[%s212 + $0x18] sm:%s205]
                  %219 = vst [vmem:[%s213 + $0x8] sm:%s205] %v218
                  %v220 = vld [vmem:[%s212 + $0x24] sm:%s205]
                  %221 = vst [vmem:[%s213 + $0xc] sm:%s205] %v220
                $region59: #{tpu_custom_call.1} parent=46 // loop_footer
                  %s211 = sadd.s32 1, %s207
                $region60: #{tpu_custom_call.1} parent=46 // loop_footer_branch
                  %206 = sbr.rel target = $region56
                $region61: #{tpu_custom_call.1} parent=46 // loop_exit
                  _
              $region47: #{tpu_custom_call.1} parent=31 // pred_fallthru
                _
            $region32: #{tpu_custom_call.1} parent=27 // pred_fallthru
              _
            // Predicated region
            $region33: #{tpu_custom_call.1} parent=27 // pred_check
              _
            $region34: #{tpu_custom_call.1} parent=27 // pred_check_branch
              %175 = sbr.rel (0) target = $region36
            $region35: #{tpu_custom_call.1} parent=27 // pred_region
              %s177 = ssub.s32 16, 1
              loop: start=0, step=1, limit=1
              $region37: #{tpu_custom_call.1} parent=35 // loop_pre_header
                _
              $region38: #{tpu_custom_call.1} parent=35 // loop_header
                %s179 = sphi 0, %s183
                %p180 = scmp.ge.s32.totalorder %s179, 1
                %s184 = sphi %s169, %s169
                %s185 = sphi %s167, %s167
              $region39: #{tpu_custom_call.1} parent=35 // loop_header_branch
                %182 = sbr.rel (%p180) target = $region43
              $region40: #{tpu_custom_call.1} parent=35 // loop_body
                %v186 = vld [vmem:[%s184] sm:%s177]
                %187 = vst [vmem:[%s185] sm:%s177] %v186
                %v188 = vld [vmem:[%s184 + $0xc] sm:%s177]
                %189 = vst [vmem:[%s185 + $0x4] sm:%s177] %v188
                %v190 = vld [vmem:[%s184 + $0x18] sm:%s177]
                %191 = vst [vmem:[%s185 + $0x8] sm:%s177] %v190
                %v192 = vld [vmem:[%s184 + $0x24] sm:%s177]
                %193 = vst [vmem:[%s185 + $0xc] sm:%s177] %v192
              $region41: #{tpu_custom_call.1} parent=35 // loop_footer
                %s183 = sadd.s32 1, %s179
              $region42: #{tpu_custom_call.1} parent=35 // loop_footer_branch
                %178 = sbr.rel target = $region38
              $region43: #{tpu_custom_call.1} parent=35 // loop_exit
                _
            $region36: #{tpu_custom_call.1} parent=27 // pred_fallthru
              _
          $region28: #{tpu_custom_call.1} parent=23 // pred_fallthru
            _
          %222 = vnop
        $region24: #{tpu_custom_call.1} parent=15 // pred_fallthru
          _
        // Predicated region
        $region62: #{tpu_custom_call.1} parent=15 // pred_check
          %p223 = pneg %p101
        $region63: #{tpu_custom_call.1} parent=15 // pred_check_branch
          %225 = sbr.rel (%p223) target = $region65
        $region64: #{tpu_custom_call.1} parent=15 // pred_region
          %s226 = sand.u32 %s91, 1
          %s227 = scalar_lea.sflag [#allocation10], %s226
          %s228 = sand.u32 %s91, 1
          %s229 = smul.addr %s228, 8
          %s230 = scalar_lea.vmem [#allocation9], %s229
          %s232 = ssub.s32 128, 128
          %233 = vsyncadd %s227, %s232
          %s234 = smul.addr %s22, 3
          %s235 = sadd.s32 %s23, %s234
          %s236 = smul.addr %s235, 128
          %s237 = scalar_lea.hbm %s2, %s236
          %s239 = sshll.u32 %s230, 4
          %s240 = int_to_ptr.vmem [resolvable:$true] %s239
          %242 = dma.hbm_to_vmem [thread:$0]  %s237, 128, %s240, %s227
        $region65: #{tpu_custom_call.1} parent=15 // pred_fallthru
          _
      $region16: #{tpu_custom_call.1} parent=5 // pred_fallthru
        _
      %p243 = scmp.le.s32.totalorder 1, %s15
      %p244 = scmp.lt.s32.totalorder %s15, 10
      %p245 = pnand %p243, %p244
      %p246 = pneg %p245
      // Predicated region
      $region66: #{tpu_custom_call.1} parent=5 // pred_check
        _
      $region67: #{tpu_custom_call.1} parent=5 // pred_check_branch
        %248 = sbr.rel (%p245) target = $region69
      $region68: #{tpu_custom_call.1} parent=5 // pred_region
        %s249 = ssub.s32 %s15, 1
        %s250 = sand.u32 %s66, 1
        %s251 = sand.u32 %s66, 1
        %s252 = smul.addr %s251, 16
        %s253 = scalar_lea.vmem [#allocation8], %s252
        // Predicated region
        $region70: #{tpu_custom_call.1} parent=68 // pred_check
          %p254 = pneg %p79
        $region71: #{tpu_custom_call.1} parent=68 // pred_check_branch
          %256 = sbr.rel (%p254) target = $region73
        $region72: #{tpu_custom_call.1} parent=68 // pred_region
          _
        $region73: #{tpu_custom_call.1} parent=68 // pred_fallthru
          _
        %s257 = sand.u32 %s94, 1
        %s258 = scalar_lea.sflag [#allocation10], %s257
        %s259 = sand.u32 %s94, 1
        %s260 = smul.addr %s259, 8
        %s261 = scalar_lea.vmem [#allocation9], %s260
        // Predicated region
        $region74: #{tpu_custom_call.1} parent=68 // pred_check
          %p262 = pneg %p107
        $region75: #{tpu_custom_call.1} parent=68 // pred_check_branch
          %264 = sbr.rel (%p262) target = $region77
        $region76: #{tpu_custom_call.1} parent=68 // pred_region
          %265 = dma.done %s258, 128
        $region77: #{tpu_custom_call.1} parent=68 // pred_fallthru
          _
        %s266 = smul.u32 4, %s24
        %p267 = scmp.lt.s32.totalorder %s266, 11
        %s268 = scalar_select %p267, %s266, 11
        %s269 = smul.addr %s268, 4
        %s270 = scalar_lea.vmem %s0, %s269
        %p271 = pneg %p53
        %p272 = pneg %p50
        %s273 = sand.u32 %s66, 1
        %s274 = sand.u32 %s66, 1
        %s275 = smul.addr %s274, 16
        %s276 = scalar_lea.vmem [#allocation8], %s275
        %p277 = pneg %p79
        %p278 = pneg %p76
        %s279 = sand.u32 %s94, 1
        %s280 = scalar_lea.sflag [#allocation10], %s279
        %s281 = sand.u32 %s94, 1
        %s282 = smul.addr %s281, 8
        %s283 = scalar_lea.vmem [#allocation9], %s282
        %p284 = pneg %p107
        %p285 = pneg %p104
        %p286 = pneg %p133
        %p287 = pneg %p130
        %s288 = sand.u32 %s120, 1
        %s289 = scalar_lea.sflag [#allocation11], %s288
        %s290 = sand.u32 %s120, 1
        %s291 = smul.addr %s290, 8
        %s292 = scalar_lea.vmem [#allocation12], %s291
        %s293 = smul.u32 4, %s24
        %p294 = scmp.lt.s32.totalorder %s293, 11
        %s295 = scalar_select %p294, %s293, 11
        %s296 = smul.addr %s295, 4
        %s297 = scalar_lea.vmem %s0, %s296
        %s298 = smul.u32 4, %s24
        %p300 = scmp.eq.s32.totalorder %s25, 0
        // Predicated region
        $region78: #{tpu_custom_call.1} parent=68 // pred_check
          %p301 = pneg %p300
        $region79: #{tpu_custom_call.1} parent=68 // pred_check_branch
          %303 = sbr.rel (%p301) target = $region81
        $region80: #{tpu_custom_call.1} parent=68 // pred_region
          %304 = vst [vmem:[#allocation2] sm:$0xff] -1e+30
          %305 = vst [vmem:[#allocation2 + $0x8] sm:$0xff] -1e+30
          %306 = vst [vmem:[#allocation2 + $0x10] sm:$0xff] -1e+30
          %307 = vst [vmem:[#allocation2 + $0x18] sm:$0xff] -1e+30
          %308 = vst [vmem:[#allocation3] sm:$0xff] 0.0
          %309 = vst [vmem:[#allocation3 + $0x8] sm:$0xff] 0.0
          %310 = vst [vmem:[#allocation3 + $0x10] sm:$0xff] 0.0
          %311 = vst [vmem:[#allocation3 + $0x18] sm:$0xff] 0.0
          %312 = vst [vmem:[#allocation4] sm:$0xff] 0.0
          %313 = vst [vmem:[#allocation4 + $0x8] sm:$0xff] 0.0
          %314 = vst [vmem:[#allocation4 + $0x10] sm:$0xff] 0.0
          %315 = vst [vmem:[#allocation4 + $0x18] sm:$0xff] 0.0
          %316 = vst [vmem:[#allocation5] sm:$0xff] 0.0
          %317 = vst [vmem:[#allocation5 + $0x8] sm:$0xff] 0.0
          %318 = vst [vmem:[#allocation5 + $0x10] sm:$0xff] 0.0
          %319 = vst [vmem:[#allocation5 + $0x18] sm:$0xff] 0.0
          %320 = vst [vmem:[#allocation6] sm:$0xff] 0.0
          %321 = vst [vmem:[#allocation6 + $0x8] sm:$0xff] 0.0
          %322 = vst [vmem:[#allocation6 + $0x10] sm:$0xff] 0.0
          %323 = vst [vmem:[#allocation6 + $0x18] sm:$0xff] 0.0
          %324 = vst [vmem:[#allocation7] sm:$0xff] 0.0
          %325 = vst [vmem:[#allocation7 + $0x8] sm:$0xff] 0.0
          %326 = vst [vmem:[#allocation7 + $0x10] sm:$0xff] 0.0
          %327 = vst [vmem:[#allocation7 + $0x18] sm:$0xff] 0.0
        $region81: #{tpu_custom_call.1} parent=68 // pred_fallthru
          _
        %v328 = vld [vmem:[%s297] sm:$0xf]
        %v329 = vld [vmem:[%s297 + $0x4] sm:$0xf]
        %v330 = vld [vmem:[%s297 + $0x8] sm:$0xf]
        %v331 = vld [vmem:[%s297 + $0xc] sm:$0xf]
        %v332 = vld [vmem:[%s253] sm:$0xf]
        %v333 = vld [vmem:[%s253 + $0x4] sm:$0xf]
        %v334 = vld [vmem:[%s253 + $0x8] sm:$0xf]
        %v335 = vld [vmem:[%s253 + $0xc] sm:$0xf]
        %v340 = vunpack.c.l.b16 %v328
        %v341 = vunpack.c.l.b16 %v329
        %v342 = vunpack.c.l.b16 %v330
        %v343 = vunpack.c.l.b16 %v331
        %v344 = vpack.c.b16 %v341, %v340
        %v345 = vpack.c.b16 %v343, %v342
        %v350 = vunpack.c.l.b16 %v332
        %v351 = vunpack.c.l.b16 %v333
        %v352 = vunpack.c.l.b16 %v334
        %v353 = vunpack.c.l.b16 %v335
        %v354 = vpack.c.b16 %v351, %v350
        %v355 = vpack.c.b16 %v353, %v352
        %vm358 = vcmask 261120
        %v360 = vsel %vm358, %v344, 0
        %v363 = vsel %vm358, %v345, 0
        %365 = vmatprep.subr.bf16.mxu0 0
        %366 = vmatpush1.bf16.msra.mxu0 0
        %367 = vmatprep.subr.bf16.mxu0 0
        %368 = vmatpush1.bf16.msra.mxu0 0
        %369 = vmatprep.subr.bf16.mxu0 0
        %370 = vmatpush1.bf16.msra.mxu0 0
        %371 = vmatprep.subr.bf16.mxu0 0
        %372 = vmatpush1.bf16.msra.mxu0 0
        %373 = vmatprep.subr.bf16.mxu0 0
        %374 = vmatpush1.bf16.msra.mxu0 0
        %375 = vmatprep.subr.bf16.mxu0 0
        %376 = vmatpush1.bf16.msra.mxu0 0
        %377 = vmatprep.subr.bf16.mxu0 0
        %378 = vmatpush1.bf16.msra.mxu0 %v355
        %379 = vmatprep.subr.bf16.mxu0 0
        %380 = vmatpush1.bf16.msra.mxu0 %v354
        %381 = vmatprep.subr.bf16.mxu0 0
        %382 = vmatpush2.bf16.msra.mxu0 0
        %383 = vmatprep.subr.bf16.mxu0 0
        %384 = vmatpush2.bf16.msra.mxu0 0
        %385 = vmatprep.subr.bf16.mxu0 0
        %386 = vmatpush2.bf16.msra.mxu0 0
        %387 = vmatprep.subr.bf16.mxu0 0
        %388 = vmatpush2.bf16.msra.mxu0 0
        %389 = vmatprep.subr.bf16.mxu0 0
        %390 = vmatpush2.bf16.msra.mxu0 0
        %391 = vmatprep.subr.bf16.mxu0 0
        %392 = vmatpush2.bf16.msra.mxu0 0
        %393 = vmatprep.subr.bf16.mxu0 0
        %394 = vmatpush2.bf16.msra.mxu0 0
        %395 = vmatprep.subr.bf16.mxu0 0
        %396 = vmatpush2.bf16.msra.mxu0 0
        %397 = vmatprep.mubr.bf16.mxu0 0
        %398 = vmatmul.mubr.bf16.gmra.mxu0 %v360
        %v399 = vpop.f32.mrf.mxu0
        %v400 = vadd.f32 0.0, %v399
        %v401 = vpop.f32.mrf.mxu0
        %v402 = vpop.f32.mrf.mxu0
        %v403 = vadd.f32 0.0, %v402
        %v404 = vpop.f32.mrf.mxu0
        %405 = vmatprep.mubr.bf16.mxu0 0
        %406 = vmatmul.mubr.bf16.gmra.mxu0 %v363
        %v407 = vpop.f32.mrf.mxu0
        %v408 = vadd.f32 0.0, %v407
        %v409 = vpop.f32.mrf.mxu0
        %v410 = vpop.f32.mrf.mxu0
        %v411 = vadd.f32 0.0, %v410
        %v412 = vpop.f32.mrf.mxu0
        %413 = vdwg.mxu0
        %v414 = vmul.f32 %v400, 7.142857
        %v415 = vmul.f32 %v403, 7.142857
        %v416 = vmul.f32 %v408, 7.142857
        %v417 = vmul.f32 %v411, 7.142857
        %s418 = smul.u32 %s25, 128
        %v419 = vlaneseq
        %v420 = vand.u32 %v419, 127
        %v421 = vstv %s418
        %v422 = vadd.s32 %v421, %v420
        %vm423 = vcmp.lt.s32.totalorder %v422, 300
        %v424 = vsel %vm423, 1, 0
        %vm425 = vcmp.eq.s32.totalorder %v424, 1
        %v426 = vsel %vm425, %v414, -1e+30
        %v427 = vsel %vm425, %v415, -1e+30
        %v428 = vsel %vm425, %v416, -1e+30
        %v429 = vsel %vm425, %v417, -1e+30
        %v430 = vld [vmem:[%s261] sm:$0xff]
        %v431 = vunpack.c.0.s8 %v430
        %v432 = vunpack.c.1.s8 %v430
        %v433 = vunpack.c.2.s8 %v430
        %v434 = vunpack.c.3.s8 %v430
        %v435 = vand.u32 %v431, 1
        %v436 = vand.u32 %v432, 1
        %v437 = vand.u32 %v433, 1
        %v438 = vand.u32 %v434, 1
        %v439 = vcvt.s32.f32 %v435
        %v440 = vcvt.s32.f32 %v436
        %v441 = vcvt.s32.f32 %v437
        %v442 = vcvt.s32.f32 %v438
        %v443 = vshra.s32 %v431, 1
        %v444 = vshra.s32 %v432, 1
        %v445 = vshra.s32 %v433, 1
        %v446 = vshra.s32 %v434, 1
        %v447 = vcvt.s32.f32 %v443
        %v448 = vcvt.s32.f32 %v444
        %v449 = vcvt.s32.f32 %v445
        %v450 = vcvt.s32.f32 %v446
        %v451 = vld [vmem:[#allocation2] sm:$0xff]
        %v452 = vld [vmem:[#allocation2 + $0x8] sm:$0xff]
        %v453 = vld [vmem:[#allocation2 + $0x10] sm:$0xff]
        %v454 = vld [vmem:[#allocation2 + $0x18] sm:$0xff]
        %v455 = vmax.f32 %v451, %v426
        %v456 = vmax.f32 %v452, %v427
        %v457 = vmax.f32 %v453, %v428
        %v458 = vmax.f32 %v454, %v429
        %v459 = vld [vmem:[#allocation3] sm:$0xff]
        %v460 = vld [vmem:[#allocation3 + $0x8] sm:$0xff]
        %v461 = vld [vmem:[#allocation3 + $0x10] sm:$0xff]
        %v462 = vld [vmem:[#allocation3 + $0x18] sm:$0xff]
        %v463 = vsub.f32 %v451, %v455
        %v464 = vsub.f32 %v452, %v456
        %v465 = vsub.f32 %v453, %v457
        %v466 = vsub.f32 %v454, %v458
        %v467 = vmul.f32 %v463, 1.442695
        %v468 = vpow.pop %v467
        %v469 = vmul.f32 %v464, 1.442695
        %v470 = vpow.pop %v469
        %v471 = vmul.f32 %v465, 1.442695
        %v472 = vpow.pop %v471
        %v473 = vmul.f32 %v466, 1.442695
        %v474 = vpow.pop %v473
        %v475 = vmul.f32 %v459, %v468
        %v476 = vmul.f32 %v460, %v470
        %v477 = vmul.f32 %v461, %v472
        %v478 = vmul.f32 %v462, %v474
        %v479 = vld [vmem:[#allocation4] sm:$0xff]
        %v480 = vld [vmem:[#allocation4 + $0x8] sm:$0xff]
        %v481 = vld [vmem:[#allocation4 + $0x10] sm:$0xff]
        %v482 = vld [vmem:[#allocation4 + $0x18] sm:$0xff]
        %v483 = vld [vmem:[#allocation5] sm:$0xff]
        %v484 = vld [vmem:[#allocation5 + $0x8] sm:$0xff]
        %v485 = vld [vmem:[#allocation5 + $0x10] sm:$0xff]
        %v486 = vld [vmem:[#allocation5 + $0x18] sm:$0xff]
        %v487 = vld [vmem:[#allocation6] sm:$0xff]
        %v488 = vld [vmem:[#allocation6 + $0x8] sm:$0xff]
        %v489 = vld [vmem:[#allocation6 + $0x10] sm:$0xff]
        %v490 = vld [vmem:[#allocation6 + $0x18] sm:$0xff]
        %v491 = vld [vmem:[#allocation7] sm:$0xff]
        %v492 = vld [vmem:[#allocation7 + $0x8] sm:$0xff]
        %v493 = vld [vmem:[#allocation7 + $0x10] sm:$0xff]
        %v494 = vld [vmem:[#allocation7 + $0x18] sm:$0xff]
        %v495 = vsub.f32 %v426, %v455
        %v496 = vsub.f32 %v427, %v456
        %v497 = vsub.f32 %v428, %v457
        %v498 = vsub.f32 %v429, %v458
        %v499 = vmul.f32 %v495, 1.442695
        %v500 = vpow.pop %v499
        %v501 = vmul.f32 %v496, 1.442695
        %v502 = vpow.pop %v501
        %v503 = vmul.f32 %v497, 1.442695
        %v504 = vpow.pop %v503
        %v505 = vmul.f32 %v498, 1.442695
        %v506 = vpow.pop %v505
        %v507 = vmul.f32 %v500, %v447
        %v508 = vmul.f32 %v502, %v448
        %v509 = vmul.f32 %v504, %v449
        %v510 = vmul.f32 %v506, %v450
        %v511 = vadd.f32 %v475, %v507
        %v512 = vadd.f32 %v476, %v508
        %v513 = vadd.f32 %v477, %v509
        %v514 = vadd.f32 %v478, %v510
        %v515 = vmul.f32 %v426, %v439
        %v516 = vmul.f32 %v427, %v440
        %v517 = vmul.f32 %v428, %v441
        %v518 = vmul.f32 %v429, %v442
        %v519 = vadd.f32 %v479, %v515
        %v520 = vadd.f32 %v480, %v516
        %v521 = vadd.f32 %v481, %v517
        %v522 = vadd.f32 %v482, %v518
        %v523 = vadd.f32 %v483, %v439
        %v524 = vadd.f32 %v484, %v440
        %v525 = vadd.f32 %v485, %v441
        %v526 = vadd.f32 %v486, %v442
        %v527 = vmul.f32 %v426, %v447
        %v528 = vmul.f32 %v427, %v448
        %v529 = vmul.f32 %v428, %v449
        %v530 = vmul.f32 %v429, %v450
        %v531 = vadd.f32 %v487, %v527
        %v532 = vadd.f32 %v488, %v528
        %v533 = vadd.f32 %v489, %v529
        %v534 = vadd.f32 %v490, %v530
        %v535 = vadd.f32 %v491, %v447
        %v536 = vadd.f32 %v492, %v448
        %v537 = vadd.f32 %v493, %v449
        %v538 = vadd.f32 %v494, %v450
        %539 = vst [vmem:[#allocation2] sm:$0xff] %v455
        %540 = vst [vmem:[#allocation2 + $0x8] sm:$0xff] %v456
        %541 = vst [vmem:[#allocation2 + $0x10] sm:$0xff] %v457
        %542 = vst [vmem:[#allocation2 + $0x18] sm:$0xff] %v458
        %543 = vst [vmem:[#allocation3] sm:$0xff] %v511
        %544 = vst [vmem:[#allocation3 + $0x8] sm:$0xff] %v512
        %545 = vst [vmem:[#allocation3 + $0x10] sm:$0xff] %v513
        %546 = vst [vmem:[#allocation3 + $0x18] sm:$0xff] %v514
        %547 = vst [vmem:[#allocation4] sm:$0xff] %v519
        %548 = vst [vmem:[#allocation4 + $0x8] sm:$0xff] %v520
        %549 = vst [vmem:[#allocation4 + $0x10] sm:$0xff] %v521
        %550 = vst [vmem:[#allocation4 + $0x18] sm:$0xff] %v522
        %551 = vst [vmem:[#allocation5] sm:$0xff] %v523
        %552 = vst [vmem:[#allocation5 + $0x8] sm:$0xff] %v524
        %553 = vst [vmem:[#allocation5 + $0x10] sm:$0xff] %v525
        %554 = vst [vmem:[#allocation5 + $0x18] sm:$0xff] %v526
        %555 = vst [vmem:[#allocation6] sm:$0xff] %v531
        %556 = vst [vmem:[#allocation6 + $0x8] sm:$0xff] %v532
        %557 = vst [vmem:[#allocation6 + $0x10] sm:$0xff] %v533
        %558 = vst [vmem:[#allocation6 + $0x18] sm:$0xff] %v534
        %559 = vst [vmem:[#allocation7] sm:$0xff] %v535
        %560 = vst [vmem:[#allocation7 + $0x8] sm:$0xff] %v536
        %561 = vst [vmem:[#allocation7 + $0x10] sm:$0xff] %v537
        %562 = vst [vmem:[#allocation7 + $0x18] sm:$0xff] %v538
        %p563 = scmp.eq.s32.totalorder %s25, 2
        // Predicated region
        $region82: #{tpu_custom_call.1} parent=68 // pred_check
          %p564 = pneg %p563
        $region83: #{tpu_custom_call.1} parent=68 // pred_check_branch
          %566 = sbr.rel (%p564) target = $region85
        $region84: #{tpu_custom_call.1} parent=68 // pred_region
          %v567 = vld [vmem:[#allocation2] sm:$0xff]
          %v568 = vld [vmem:[#allocation2 + $0x8] sm:$0xff]
          %v569 = vld [vmem:[#allocation2 + $0x10] sm:$0xff]
          %v570 = vld [vmem:[#allocation2 + $0x18] sm:$0xff]
          %v571 = vld [vmem:[#allocation3] sm:$0xff]
          %v572 = vld [vmem:[#allocation3 + $0x8] sm:$0xff]
          %v573 = vld [vmem:[#allocation3 + $0x10] sm:$0xff]
          %v574 = vld [vmem:[#allocation3 + $0x18] sm:$0xff]
          %575 = vmax.xlane.f32.xlu0 %v567
          %v576 = vpop.xlane.xlu0 %575
          %577 = vmax.xlane.f32.xlu0 %v568
          %v578 = vpop.xlane.xlu0 %577
          %579 = vmax.xlane.f32.xlu0 %v569
          %v580 = vpop.xlane.xlu0 %579
          %581 = vmax.xlane.f32.xlu0 %v570
          %v582 = vpop.xlane.xlu0 %581
          %v583 = vsub.f32 %v567, %v576
          %v584 = vsub.f32 %v568, %v578
          %v585 = vsub.f32 %v569, %v580
          %v586 = vsub.f32 %v570, %v582
          %v587 = vmul.f32 %v583, 1.442695
          %v588 = vpow.pop %v587
          %v589 = vmul.f32 %v584, 1.442695
          %v590 = vpow.pop %v589
          %v591 = vmul.f32 %v585, 1.442695
          %v592 = vpow.pop %v591
          %v593 = vmul.f32 %v586, 1.442695
          %v594 = vpow.pop %v593
          %v595 = vmul.f32 %v571, %v588
          %v596 = vmul.f32 %v572, %v590
          %v597 = vmul.f32 %v573, %v592
          %v598 = vmul.f32 %v574, %v594
          %599 = vadd.xlane.f32.xlu0 %v595
          %v600 = vpop.xlane.xlu0 %599
          %601 = vadd.xlane.f32.xlu0 %v596
          %v602 = vpop.xlane.xlu0 %601
          %603 = vadd.xlane.f32.xlu0 %v597
          %v604 = vpop.xlane.xlu0 %603
          %605 = vadd.xlane.f32.xlu0 %v598
          %v606 = vpop.xlane.xlu0 %605
          %v607 = vld [vmem:[#allocation4] sm:$0xff]
          %v608 = vld [vmem:[#allocation4 + $0x8] sm:$0xff]
          %v609 = vld [vmem:[#allocation4 + $0x10] sm:$0xff]
          %v610 = vld [vmem:[#allocation4 + $0x18] sm:$0xff]
          %611 = vadd.xlane.f32.xlu0 %v607
          %v612 = vpop.xlane.xlu0 %611
          %613 = vadd.xlane.f32.xlu0 %v608
          %v614 = vpop.xlane.xlu0 %613
          %615 = vadd.xlane.f32.xlu0 %v609
          %v616 = vpop.xlane.xlu0 %615
          %617 = vadd.xlane.f32.xlu0 %v610
          %v618 = vpop.xlane.xlu0 %617
          %v619 = vld [vmem:[#allocation5] sm:$0xff]
          %v620 = vld [vmem:[#allocation5 + $0x8] sm:$0xff]
          %v621 = vld [vmem:[#allocation5 + $0x10] sm:$0xff]
          %v622 = vld [vmem:[#allocation5 + $0x18] sm:$0xff]
          %623 = vadd.xlane.f32.xlu0 %v619
          %v624 = vpop.xlane.xlu0 %623
          %625 = vadd.xlane.f32.xlu0 %v620
          %v626 = vpop.xlane.xlu0 %625
          %627 = vadd.xlane.f32.xlu0 %v621
          %v628 = vpop.xlane.xlu0 %627
          %629 = vadd.xlane.f32.xlu0 %v622
          %v630 = vpop.xlane.xlu0 %629
          %v631 = vld [vmem:[#allocation6] sm:$0xff]
          %v632 = vld [vmem:[#allocation6 + $0x8] sm:$0xff]
          %v633 = vld [vmem:[#allocation6 + $0x10] sm:$0xff]
          %v634 = vld [vmem:[#allocation6 + $0x18] sm:$0xff]
          %635 = vadd.xlane.f32.xlu0 %v631
          %v636 = vpop.xlane.xlu0 %635
          %637 = vadd.xlane.f32.xlu0 %v632
          %v638 = vpop.xlane.xlu0 %637
          %639 = vadd.xlane.f32.xlu0 %v633
          %v640 = vpop.xlane.xlu0 %639
          %641 = vadd.xlane.f32.xlu0 %v634
          %v642 = vpop.xlane.xlu0 %641
          %v643 = vld [vmem:[#allocation7] sm:$0xff]
          %v644 = vld [vmem:[#allocation7 + $0x8] sm:$0xff]
          %v645 = vld [vmem:[#allocation7 + $0x10] sm:$0xff]
          %v646 = vld [vmem:[#allocation7 + $0x18] sm:$0xff]
          %647 = vadd.xlane.f32.xlu0 %v643
          %v648 = vpop.xlane.xlu0 %647
          %649 = vadd.xlane.f32.xlu0 %v644
          %v650 = vpop.xlane.xlu0 %649
          %651 = vadd.xlane.f32.xlu0 %v645
          %v652 = vpop.xlane.xlu0 %651
          %653 = vadd.xlane.f32.xlu0 %v646
          %v654 = vpop.xlane.xlu0 %653
          %v655 = vadd.f32 %v600, 1e-12
          %v656 = vadd.f32 %v602, 1e-12
          %v657 = vadd.f32 %v604, 1e-12
          %v658 = vadd.f32 %v606, 1e-12
          %v659 = vlog2.pop %v655
          %v660 = vmul.f32 %v659, 0.6931472
          %v661 = vlog2.pop %v656
          %v662 = vmul.f32 %v661, 0.6931472
          %v663 = vlog2.pop %v657
          %v664 = vmul.f32 %v663, 0.6931472
          %v665 = vlog2.pop %v658
          %v666 = vmul.f32 %v665, 0.6931472
          %v667 = vadd.f32 %v576, %v660
          %v668 = vadd.f32 %v578, %v662
          %v669 = vadd.f32 %v580, %v664
          %v670 = vadd.f32 %v582, %v666
          %v671 = vmul.f32 %v667, %v624
          %v672 = vmul.f32 %v668, %v626
          %v673 = vmul.f32 %v669, %v628
          %v674 = vmul.f32 %v670, %v630
          %v675 = vsub.f32 %v612, %v671
          %v676 = vsub.f32 %v614, %v672
          %v677 = vsub.f32 %v616, %v673
          %v678 = vsub.f32 %v618, %v674
          %v679 = vadd.f32 %v624, 1e-12
          %v680 = vadd.f32 %v626, 1e-12
          %v681 = vadd.f32 %v628, 1e-12
          %v682 = vadd.f32 %v630, 1e-12
          %v683 = vrcp.pop %v679
          %v684 = vmul.f32 %v675, %v683
          %v685 = vrcp.pop %v680
          %v686 = vmul.f32 %v676, %v685
          %v687 = vrcp.pop %v681
          %v688 = vmul.f32 %v677, %v687
          %v689 = vrcp.pop %v682
          %v690 = vmul.f32 %v678, %v689
          %v691 = vmul.f32 %v684, -1.0
          %v692 = vmul.f32 %v686, -1.0
          %v693 = vmul.f32 %v688, -1.0
          %v694 = vmul.f32 %v690, -1.0
          %s695 = smul.u32 %s24, 32
          %v696 = vlaneseq
          %v697 = vshrl.u32 %v696, 7
          %v698 = vadd.s32 %v697, 8
          %v699 = vadd.s32 %v697, 16
          %v700 = vadd.s32 %v697, 24
          %v701 = vstv %s695
          %v702 = vadd.s32 %v701, %v697
          %v703 = vadd.s32 %v701, %v698
          %v704 = vadd.s32 %v701, %v699
          %v705 = vadd.s32 %v701, %v700
          %vm706 = vcmp.lt.s32.totalorder %v702, 72
          %vm707 = vcmp.lt.s32.totalorder %v703, 72
          %vm708 = vcmp.lt.s32.totalorder %v704, 72
          %vm709 = vcmp.lt.s32.totalorder %v705, 72
          %v710 = vsel %vm706, %v691, 0.0
          %v711 = vsel %vm707, %v692, 0.0
          %v712 = vsel %vm708, %v693, 0.0
          %v713 = vsel %vm709, %v694, 0.0
          %vm714 = vcmask 7168
          %v715 = vsel %vm714, %v710, 0.0
          %v716 = vsel %vm714, %v711, 0.0
          %v717 = vadd.f32 %v715, %v716
          %v718 = vsel %vm714, %v712, 0.0
          %v719 = vadd.f32 %v717, %v718
          %v720 = vsel %vm714, %v713, 0.0
          %v721 = vadd.f32 %v719, %v720
          %722 = vadd.xlane.f32.xlu0 %v721
          %v723 = vpop.xlane.xlu0 %722
          %v724 = vrot.slane %v723, 4
          %v725 = vadd.f32 %v723, %v724
          %v726 = vrot.slane %v725, 2
          %v727 = vadd.f32 %v725, %v726
          %v728 = vrot.slane %v727, 1
          %v729 = vadd.f32 %v727, %v728
          %s730 = vtos %v729
          %v731 = vsel %vm706, %v612, 0.0
          %v732 = vsel %vm707, %v614, 0.0
          %v733 = vsel %vm708, %v616, 0.0
          %v734 = vsel %vm709, %v618, 0.0
          %v735 = vsel %vm714, %v731, 0.0
          %v736 = vsel %vm714, %v732, 0.0
          %v737 = vadd.f32 %v735, %v736
          %v738 = vsel %vm714, %v733, 0.0
          %v739 = vadd.f32 %v737, %v738
          %v740 = vsel %vm714, %v734, 0.0
          %v741 = vadd.f32 %v739, %v740
          %742 = vadd.xlane.f32.xlu0 %v741
          %v743 = vpop.xlane.xlu0 %742
          %v744 = vrot.slane %v743, 4
          %v745 = vadd.f32 %v743, %v744
          %v746 = vrot.slane %v745, 2
          %v747 = vadd.f32 %v745, %v746
          %v748 = vrot.slane %v747, 1
          %v749 = vadd.f32 %v747, %v748
          %s750 = vtos %v749
          %v751 = vsel %vm706, %v624, 0.0
          %v752 = vsel %vm707, %v626, 0.0
          %v753 = vsel %vm708, %v628, 0.0
          %v754 = vsel %vm709, %v630, 0.0
          %v755 = vsel %vm714, %v751, 0.0
          %v756 = vsel %vm714, %v752, 0.0
          %v757 = vadd.f32 %v755, %v756
          %v758 = vsel %vm714, %v753, 0.0
          %v759 = vadd.f32 %v757, %v758
          %v760 = vsel %vm714, %v754, 0.0
          %v761 = vadd.f32 %v759, %v760
          %762 = vadd.xlane.f32.xlu0 %v761
          %v763 = vpop.xlane.xlu0 %762
          %v764 = vrot.slane %v763, 4
          %v765 = vadd.f32 %v763, %v764
          %v766 = vrot.slane %v765, 2
          %v767 = vadd.f32 %v765, %v766
          %v768 = vrot.slane %v767, 1
          %v769 = vadd.f32 %v767, %v768
          %s770 = vtos %v769
          %v771 = vsel %vm706, %v636, 0.0
          %v772 = vsel %vm707, %v638, 0.0
          %v773 = vsel %vm708, %v640, 0.0
          %v774 = vsel %vm709, %v642, 0.0
          %v775 = vsel %vm714, %v771, 0.0
          %v776 = vsel %vm714, %v772, 0.0
          %v777 = vadd.f32 %v775, %v776
          %v778 = vsel %vm714, %v773, 0.0
          %v779 = vadd.f32 %v777, %v778
          %v780 = vsel %vm714, %v774, 0.0
          %v781 = vadd.f32 %v779, %v780
          %782 = vadd.xlane.f32.xlu0 %v781
          %v783 = vpop.xlane.xlu0 %782
          %v784 = vrot.slane %v783, 4
          %v785 = vadd.f32 %v783, %v784
          %v786 = vrot.slane %v785, 2
          %v787 = vadd.f32 %v785, %v786
          %v788 = vrot.slane %v787, 1
          %v789 = vadd.f32 %v787, %v788
          %s790 = vtos %v789
          %v791 = vsel %vm706, %v648, 0.0
          %v792 = vsel %vm707, %v650, 0.0
          %v793 = vsel %vm708, %v652, 0.0
          %v794 = vsel %vm709, %v654, 0.0
          %v795 = vsel %vm714, %v791, 0.0
          %v796 = vsel %vm714, %v792, 0.0
          %v797 = vadd.f32 %v795, %v796
          %v798 = vsel %vm714, %v793, 0.0
          %v799 = vadd.f32 %v797, %v798
          %v800 = vsel %vm714, %v794, 0.0
          %v801 = vadd.f32 %v799, %v800
          %802 = vadd.xlane.f32.xlu0 %v801
          %v803 = vpop.xlane.xlu0 %802
          %v804 = vrot.slane %v803, 4
          %v805 = vadd.f32 %v803, %v804
          %v806 = vrot.slane %v805, 2
          %v807 = vadd.f32 %v805, %v806
          %v808 = vrot.slane %v807, 1
          %v809 = vadd.f32 %v807, %v808
          %s810 = vtos %v809
          %vm811 = vcmp.eq.s32.totalorder %v697, 0
          %vm812 = vcmp.eq.s32.totalorder %v697, 1
          %vm813 = vcmp.eq.s32.totalorder %v697, 2
          %vm814 = vcmp.eq.s32.totalorder %v697, 3
          %vm815 = vcmp.eq.s32.totalorder %v697, 4
          %v816 = vstv %s810
          %v817 = vsel %vm815, %v816, 0.0
          %v818 = vstv %s790
          %v819 = vsel %vm814, %v818, %v817
          %v820 = vstv %s770
          %v821 = vsel %vm813, %v820, %v819
          %v822 = vstv %s750
          %v823 = vsel %vm812, %v822, %v821
          %v824 = vstv %s730
          %v825 = vsel %vm811, %v824, %v823
          %826 = vst [vmem:[%s292] sm:$0xff] %v825
        $region85: #{tpu_custom_call.1} parent=68 // pred_fallthru
          _
        %s827 = sand.u32 %s120, 1
        %s828 = scalar_lea.sflag [#allocation11], %s827
        %s829 = sand.u32 %s120, 1
        %s830 = smul.addr %s829, 8
        %s831 = scalar_lea.vmem [#allocation12], %s830
        // Predicated region
        $region86: #{tpu_custom_call.1} parent=68 // pred_check
          %p832 = pneg %p130
        $region87: #{tpu_custom_call.1} parent=68 // pred_check_branch
          %834 = sbr.rel (%p832) target = $region89
        $region88: #{tpu_custom_call.1} parent=68 // pred_region
          %s836 = ssub.s32 128, 128
          %837 = vsyncadd %s828, %s836
          %s838 = smul.addr %s24, 128
          %s839 = scalar_lea.hbm %s3, %s838
          %s841 = sshll.u32 %s831, 4
          %s842 = int_to_ptr.vmem [resolvable:$true] %s841
          %844 = dma.vmem_to_hbm [thread:$0]  %s842, 128, %s839, %s828
        $region89: #{tpu_custom_call.1} parent=68 // pred_fallthru
          _
      $region69: #{tpu_custom_call.1} parent=5 // pred_fallthru
        _
      %p845 = scmp.le.s32.totalorder 2, %s15
      // Predicated region
      $region90: #{tpu_custom_call.1} parent=5 // pred_check
        %p846 = pneg %p845
      $region91: #{tpu_custom_call.1} parent=5 // pred_check_branch
        %848 = sbr.rel (%p846) target = $region93
      $region92: #{tpu_custom_call.1} parent=5 // pred_region
        %s849 = ssub.s32 %s15, 2
        // Predicated region
        $region94: #{tpu_custom_call.1} parent=92 // pred_check
          %p850 = pneg %p136
        $region95: #{tpu_custom_call.1} parent=92 // pred_check_branch
          %852 = sbr.rel (%p850) target = $region97
        $region96: #{tpu_custom_call.1} parent=92 // pred_region
          %s853 = sand.u32 %s121, 1
          %s854 = scalar_lea.sflag [#allocation11], %s853
          %s855 = sand.u32 %s121, 1
          %s856 = smul.addr %s855, 8
          %s857 = scalar_lea.vmem [#allocation12], %s856
          %858 = dma.done %s854, 128
        $region97: #{tpu_custom_call.1} parent=92 // pred_fallthru
          _
      $region93: #{tpu_custom_call.1} parent=5 // pred_fallthru
        _
    $region6: #{tpu_custom_call.1} parent=1 // loop_footer
      %s19 = sadd.s32 1, %s15
    $region7: #{tpu_custom_call.1} parent=1 // loop_footer_branch
      %14 = sbr.rel target = $region3
    $region8: #{tpu_custom_call.1} parent=1 // loop_exit
      _
    %859 = vsyncpa [#allocation10], 1
    %s860 = scalar_lea.sflag [#allocation10], 1
    %861 = vsyncpa %s860, 1
    %862 = vsyncpa [#allocation11], 1
    %s863 = scalar_lea.sflag [#allocation11], 1
    %864 = vsyncpa %s863, 1

</llo_original>
